<compile_context>
chip_gen: v6e
topology: v6e:2x2x1
jax: 0.10.0
libtpu: 0.0.40
codegen_flags: <defaults>
</compile_context>

<pallas_src>
import math

import jax
import jax.numpy as jnp
import numpy as np
from jax.experimental import pallas as pl
from jax.experimental.pallas import tpu as pltpu


def _egat_kernel(h_ref, msg_ref, mask_ref, waug_ref, out_ref):
    TB, N, _ = mask_ref.shape
    Dout = waug_ref.shape[1] - 2

    # Promote streamed inputs to f32 once; all math below is f32.
    W_aug = waug_ref[...].astype(jnp.float32)      # [Din, Dout+2] (resident, constant block)
    h = h_ref[...].astype(jnp.float32)             # [TB, Din]
    msg = msg_ref[...].astype(jnp.float32)         # [TB*N, Din]
    mask = mask_ref[...]                           # [TB, N, 1] float32

    # Single MXU matmul per operand.  W_aug = [W | W@a[:Dout] | W@a[Dout:]], so
    #   column  Dout   of h   @ W_aug  is e_self = (h W) . a[:Dout]
    #   column  Dout+1 of msg @ W_aug  is e_msg  = (m W) . a[Dout:]
    hW_aug = jnp.dot(h, W_aug, preferred_element_type=jnp.float32)     # [TB, Dout+2]
    HW_aug = jnp.dot(msg, W_aug, preferred_element_type=jnp.float32)   # [TB*N, Dout+2]
    HW_aug = HW_aug.reshape(TB, N, Dout + 2)                           # N==8 -> free reshape

    hW = hW_aug[:, :Dout]                          # [TB, Dout]
    e_self = hW_aug[:, Dout:Dout + 1]              # [TB, 1]
    HW = HW_aug[:, :, :Dout]                       # [TB, N, Dout]
    e_msg = HW_aug[:, :, Dout + 1:Dout + 2]        # [TB, N, 1]

    # E = LeakyReLU( [h_repeat, H] @ a ), split over the two halves of the concat.
    e = e_self[:, None, :] + e_msg                 # [TB, N, 1]
    e = jnp.where(e > 0, e, 0.2 * e)               # LeakyReLU(negative_slope=0.2)

    # mask + softmax over the agent axis (sublane axis here).
    att = jnp.where(mask > 0, e, jnp.full_like(e, -9.0e15))
    att_max = jnp.max(att, axis=1, keepdims=True)                      # [TB, 1, 1]
    p = jnp.exp(att - att_max)                                         # [TB, N, 1]
    denom = jnp.sum(p, axis=1, keepdims=True)                          # [TB, 1, 1]
    alpha = p * pl.reciprocal(denom, approx=True)                      # EUP, not VALU divide

    # attention-weighted sum of projected messages.
    ws = jnp.sum(alpha * HW, axis=1)                                   # [TB, Dout]

    # rows whose mask is entirely zero contribute no weighted sum (0/1 mask assumed,
    # matching torch.all(mask == 0) for adjacency masks).
    keep = (jnp.sum(mask, axis=1) > 0.0).astype(jnp.float32)           # [TB, 1]
    ws = ws * keep

    z = hW + ws
    # ELU(alpha=1.0); clamp the exp argument so the untaken branch cannot overflow.
    out_ref[...] = jnp.where(z > 0, z, jnp.exp(jnp.minimum(z, 0.0)) - 1.0)


def _pick_tile_b(B, N, Din, Dout, in_bytes):
    """Largest batch tile that (a) divides B, (b) keeps the 2-D blocks (8,128)-legal,
    (c) fits a conservative VMEM budget (blocks double-buffered + f32 intermediates)
    under every generation's default scoped-VMEM limit, and (d) leaves >=2 grid steps
    when possible so the 'parallel' grid axis can shard across v7x's two TensorCores."""
    block_row = Din * in_bytes + N * Din * in_bytes + 4 * N + 4 * Dout
    interm_row = 4 * N * (Din + 3 * (Dout + 2)) + 8 * (Dout + 2)   # rough upper bound
    per_row = 2 * block_row + interm_row                           # x2 = double buffering
    max_rows = max(1, (12 << 20) // per_row)                       # < 16 MiB v5e default
    valid = [t for t in range(1, B + 1)
             if B % t == 0 and t <= max_rows and (t % 8 == 0 or t == B)]
    if not valid:
        return B
    multi = [t for t in valid if B // t >= 2]
    return max(multi) if multi else max(valid)


def e_gat_forward(h, message, mask, W, a, *, tile_b=None, input_dtype=jnp.bfloat16):
    """Pallas E_GAT forward.  Tiles over the batch dimension; each grid step keeps its
    (tile_b*N, Din) flat message block, h/mask blocks and the augmented weight matrix
    resident in VMEM and does two MXU matmuls plus a tiny softmax/ELU epilogue."""
    B, N, Din = message.shape
    Dout = W.shape[1]
    assert a.shape == (2 * Dout, 1)

    # Fold the attention projections into two extra matmul columns (wrapper-side, one-off).
    a1 = a[:Dout, 0]
    a2 = a[Dout:, 0]
    W_aug = jnp.concatenate([W, (W @ a1)[:, None], (W @ a2)[:, None]], axis=1)   # [Din, Dout+2]
    W_aug = W_aug.astype(jnp.float32)   # tiny + resident: keep full precision

    # Stream the big operands in a compact dtype; accumulation stays f32 in-kernel.
    h_in = h.astype(input_dtype)
    msg_flat = message.reshape(B * N, Din).astype(input_dtype)
    mask3 = mask.reshape(B, N, 1).astype(jnp.float32)

    if tile_b is None:
        tile_b = _pick_tile_b(B, N, Din, Dout, jnp.dtype(input_dtype).itemsize)
    assert B % tile_b == 0, "tile_b must divide the batch dimension"
    grid = (B // tile_b,)

    # NOTE: output stays [B, Dout] f32 (Dout=32 < 128 lanes -> masked stores); packing it
    # lane-dense would require changing the downstream consumer's layout.
    return pl.pallas_call(
        _egat_kernel,
        out_shape=jax.ShapeDtypeStruct((B, Dout), jnp.float32),
        grid=grid,
        in_specs=[
            pl.BlockSpec((tile_b, Din), lambda i: (i, 0)),
            pl.BlockSpec((tile_b * N, Din), lambda i: (i, 0)),
            pl.BlockSpec((tile_b, N, 1), lambda i: (i, 0, 0)),
            pl.BlockSpec((Din, Dout + 2), lambda i: (0, 0)),
        ],
        out_specs=pl.BlockSpec((tile_b, Dout), lambda i: (i, 0)),
        compiler_params=pltpu.CompilerParams(
            dimension_semantics=("parallel",)),
    )(h_in, msg_flat, mask3, W_aug)


def e_gat_reference(h, message, mask, W, a):
    """Pure-JAX mirror of the PyTorch forward (for correctness checking)."""
    hW = h @ W
    HW = jnp.einsum("bnd,de->bne", message, W)
    n_agent = message.shape[-2]
    h_rep = jnp.repeat(hW[:, None, :], n_agent, axis=1)
    Hcat = jnp.concatenate([h_rep, HW], axis=-1)
    E = (Hcat @ a)[..., 0]
    E = jnp.where(E > 0, E, 0.2 * E)
    att = jnp.where(mask > 0, E, -9.0e15)
    alpha = jax.nn.softmax(att, axis=-1)
    ws = jnp.sum(alpha[..., None] * HW, axis=-2)
    not_all = jnp.logical_not(jnp.all(mask == 0, axis=-1)).astype(jnp.float32)
    ws = ws * not_all[:, None]
    z = hW + ws
    return jnp.where(z > 0, z, jnp.expm1(jnp.minimum(z, 0.0)))


if __name__ == "__main__":
    B, N, Din, Dout = 16, 8, 32, 32  # n_agent = N

    key = jax.random.PRNGKey(0)
    k1, k2, k3, k4, k5 = jax.random.split(key, 5)

    # Deterministic parameter init mirroring init_parameters():
    # uniform(-stdv, stdv) with stdv = 1/sqrt(param.size(-1))
    stdv_W = 1.0 / math.sqrt(Dout)
    W = jax.random.uniform(k1, (Din, Dout), jnp.float32, -stdv_W, stdv_W)
    stdv_a = 1.0 / math.sqrt(1)
    a = jax.random.uniform(k2, (2 * Dout, 1), jnp.float32, -stdv_a, stdv_a)

    h = jax.random.normal(k3, (B, Din), jnp.float32)
    message = jax.random.normal(k4, (B, N, Din), jnp.float32)
    mask = (jax.random.uniform(k5, (B, N)) > 0.4).astype(jnp.float32)
    mask = mask.at[0].set(0.0)  # one fully-masked row exercises the is_all_zero branch

    ref = e_gat_reference(h, message, mask, W, a)

    # 1) f32 streaming path: must match the reference tightly (only approx-reciprocal
    #    and accumulation-order differences).
    out_f32 = jax.block_until_ready(
        e_gat_forward(h, message, mask, W, a, input_dtype=jnp.float32))
    assert out_f32.shape == (B, Dout)
    np.testing.assert_allclose(np.asarray(out_f32), np.asarray(ref), rtol=5e-3, atol=5e-3)

    # 2) default bf16 streaming path (bandwidth-optimized): looser tolerance covers the
    #    bf16 rounding of h/message; accumulation is still f32.
    out = jax.block_until_ready(e_gat_forward(h, message, mask, W, a))
    assert out.shape == (B, Dout)
    np.testing.assert_allclose(np.asarray(out), np.asarray(ref), rtol=5e-2, atol=5e-2)

    print("KERNEL_OK")
</pallas_src>

<mosaic_0001>
module attributes {stable_mosaic.version = 11 : i64} {
  func.func @_egat_kernel(%arg0: i32, %arg1: memref<8x32xf32, #tpu.memory_space<vmem>>, %arg2: memref<64x32xf32, #tpu.memory_space<vmem>>, %arg3: memref<8x8x1xf32, #tpu.memory_space<vmem>>, %arg4: memref<32x34xf32, #tpu.memory_space<vmem>>, %arg5: memref<8x32xf32, #tpu.memory_space<vmem>>) attributes {dimension_semantics = [#tpu.dimension_semantics<parallel>], iteration_bounds = array<i64: 2>, scalar_prefetch = 0 : i64, scratch_operands = 0 : i64, tpu.core_type = #tpu.core_type<tc>, window_params = [{transform_indices = @transform_0, window_bounds = array<i64: 8, 32>}, {transform_indices = @transform_1, window_bounds = array<i64: 64, 32>}, {transform_indices = @transform_2, window_bounds = array<i64: 8, 8, 1>}, {pipeline_mode = #tpu.pipeline_mode<synchronous>, transform_indices = @transform_3, window_bounds = array<i64: 32, 34>}, {transform_indices = @transform_4, window_bounds = array<i64: 8, 32>}]} {
    %c0 = arith.constant 0 : index
    %c0_0 = arith.constant 0 : index
    %0 = vector.load %arg4[%c0, %c0_0] : memref<32x34xf32, #tpu.memory_space<vmem>>, vector<32x34xf32>
    %c0_1 = arith.constant 0 : index
    %c0_2 = arith.constant 0 : index
    %1 = vector.load %arg1[%c0_1, %c0_2] : memref<8x32xf32, #tpu.memory_space<vmem>>, vector<8x32xf32>
    %c0_3 = arith.constant 0 : index
    %c0_4 = arith.constant 0 : index
    %2 = vector.load %arg2[%c0_3, %c0_4] : memref<64x32xf32, #tpu.memory_space<vmem>>, vector<64x32xf32>
    %c0_5 = arith.constant 0 : index
    %c0_6 = arith.constant 0 : index
    %c0_7 = arith.constant 0 : index
    %3 = vector.load %arg3[%c0_5, %c0_6, %c0_7] : memref<8x8x1xf32, #tpu.memory_space<vmem>>, vector<8x8x1xf32>
    %cst = arith.constant dense<0.000000e+00> : vector<8x34xf32>
    %4 = tpu.matmul %1, %0, %cst {dimension_numbers = #tpu.dot_dimension_numbers<[1], [0], [0], [1], [0, 0, 1, 1], [], []>} : vector<8x32xf32>, vector<32x34xf32>, vector<8x34xf32> -> vector<8x34xf32>
    %cst_8 = arith.constant dense<0.000000e+00> : vector<64x34xf32>
    %5 = tpu.matmul %2, %0, %cst_8 {dimension_numbers = #tpu.dot_dimension_numbers<[1], [0], [0], [1], [0, 0, 1, 1], [], []>} : vector<64x32xf32>, vector<32x34xf32>, vector<64x34xf32> -> vector<64x34xf32>
    %6 = vector.shape_cast %5 : vector<64x34xf32> to vector<8x8x34xf32>
    %7 = vector.extract_strided_slice %4 {offsets = [0, 0], sizes = [8, 32], strides = [1, 1]} : vector<8x34xf32> to vector<8x32xf32>
    %8 = vector.extract_strided_slice %4 {offsets = [0, 32], sizes = [8, 1], strides = [1, 1]} : vector<8x34xf32> to vector<8x1xf32>
    %9 = vector.extract_strided_slice %6 {offsets = [0, 0, 0], sizes = [8, 8, 32], strides = [1, 1, 1]} : vector<8x8x34xf32> to vector<8x8x32xf32>
    %10 = vector.extract_strided_slice %6 {offsets = [0, 0, 33], sizes = [8, 8, 1], strides = [1, 1, 1]} : vector<8x8x34xf32> to vector<8x8x1xf32>
    %11 = vector.shape_cast %8 : vector<8x1xf32> to vector<8x1x1xf32>
    %12 = vector.broadcast %11 : vector<8x1x1xf32> to vector<8x8x1xf32>
    %13 = arith.addf %12, %10 : vector<8x8x1xf32>
    %cst_9 = arith.constant 0.000000e+00 : f32
    %14 = vector.broadcast %cst_9 : f32 to vector<8x8x1xf32>
    %15 = arith.cmpf ogt, %13, %14 : vector<8x8x1xf32>
    %cst_10 = arith.constant 2.000000e-01 : f32
    %16 = vector.broadcast %cst_10 : f32 to vector<8x8x1xf32>
    %17 = arith.mulf %16, %13 : vector<8x8x1xf32>
    %18 = arith.select %15, %13, %17 : vector<8x8x1xi1>, vector<8x8x1xf32>
    %cst_11 = arith.constant 0.000000e+00 : f32
    %19 = vector.broadcast %cst_11 : f32 to vector<8x8x1xf32>
    %20 = arith.cmpf ogt, %3, %19 : vector<8x8x1xf32>
    %cst_12 = arith.constant -9.000000e+15 : f32
    %21 = vector.broadcast %cst_12 : f32 to vector<8x8x1xf32>
    %22 = arith.select %20, %18, %21 : vector<8x8x1xi1>, vector<8x8x1xf32>
    %cst_13 = arith.constant dense<0xFF800000> : vector<8x1xf32>
    %23 = vector.multi_reduction <maximumf>, %22, %cst_13 [1] : vector<8x8x1xf32> to vector<8x1xf32>
    %24 = vector.shape_cast %23 : vector<8x1xf32> to vector<8x1x1xf32>
    %25 = vector.broadcast %24 : vector<8x1x1xf32> to vector<8x8x1xf32>
    %26 = arith.subf %22, %25 : vector<8x8x1xf32>
    %27 = math.exp %26 : vector<8x8x1xf32>
    %cst_14 = arith.constant dense<0.000000e+00> : vector<8x1xf32>
    %28 = vector.multi_reduction <add>, %27, %cst_14 [1] : vector<8x8x1xf32> to vector<8x1xf32>
    %29 = vector.shape_cast %28 : vector<8x1xf32> to vector<8x1x1xf32>
    %30 = tpu.reciprocal %29 {approx = true} : vector<8x1x1xf32> -> vector<8x1x1xf32>
    %31 = vector.broadcast %30 : vector<8x1x1xf32> to vector<8x8x1xf32>
    %32 = arith.mulf %27, %31 : vector<8x8x1xf32>
    %33 = vector.broadcast %32 : vector<8x8x1xf32> to vector<8x8x32xf32>
    %34 = arith.mulf %33, %9 : vector<8x8x32xf32>
    %cst_15 = arith.constant dense<0.000000e+00> : vector<8x32xf32>
    %35 = vector.multi_reduction <add>, %34, %cst_15 [1] : vector<8x8x32xf32> to vector<8x32xf32>
    %cst_16 = arith.constant dense<0.000000e+00> : vector<8x1xf32>
    %36 = vector.multi_reduction <add>, %3, %cst_16 [1] : vector<8x8x1xf32> to vector<8x1xf32>
    %cst_17 = arith.constant 0.000000e+00 : f32
    %37 = vector.broadcast %cst_17 : f32 to vector<8x1xf32>
    %38 = arith.cmpf ogt, %36, %37 : vector<8x1xf32>
    %39 = arith.extui %38 : vector<8x1xi1> to vector<8x1xi32>
    %40 = arith.sitofp %39 : vector<8x1xi32> to vector<8x1xf32>
    %41 = vector.broadcast %40 : vector<8x1xf32> to vector<8x32xf32>
    %42 = arith.mulf %35, %41 : vector<8x32xf32>
    %43 = arith.addf %7, %42 : vector<8x32xf32>
    %cst_18 = arith.constant 0.000000e+00 : f32
    %44 = vector.broadcast %cst_18 : f32 to vector<8x32xf32>
    %45 = arith.cmpf ogt, %43, %44 : vector<8x32xf32>
    %cst_19 = arith.constant 0.000000e+00 : f32
    %46 = vector.broadcast %cst_19 : f32 to vector<8x32xf32>
    %47 = arith.minimumf %43, %46 : vector<8x32xf32>
    %48 = math.exp %47 : vector<8x32xf32>
    %cst_20 = arith.constant 1.000000e+00 : f32
    %49 = vector.broadcast %cst_20 : f32 to vector<8x32xf32>
    %50 = arith.subf %48, %49 : vector<8x32xf32>
    %51 = arith.select %45, %43, %50 : vector<8x32xi1>, vector<8x32xf32>
    %c0_21 = arith.constant 0 : index
    %c0_22 = arith.constant 0 : index
    %52 = vector.load %arg5[%c0_21, %c0_22] : memref<8x32xf32, #tpu.memory_space<vmem>>, vector<8x32xf32>
    tpu.vector_store %arg5[%c0_21, %c0_22], %51 {strides = array<i32>} : memref<8x32xf32, #tpu.memory_space<vmem>>, vector<8x32xf32>,
    return
  }
  func.func @transform_0(%arg0: i32) -> (i32, i32) {
    %c0_i32 = arith.constant 0 : i32
    %c0_i32_0 = arith.constant 0 : i32
    return %arg0, %c0_i32 : i32, i32
  }
  func.func @transform_1(%arg0: i32) -> (i32, i32) {
    %c0_i32 = arith.constant 0 : i32
    %c0_i32_0 = arith.constant 0 : i32
    return %arg0, %c0_i32 : i32, i32
  }
  func.func @transform_2(%arg0: i32) -> (i32, i32, i32) {
    %c0_i32 = arith.constant 0 : i32
    %c0_i32_0 = arith.constant 0 : i32
    %c0_i32_1 = arith.constant 0 : i32
    return %arg0, %c0_i32, %c0_i32_0 : i32, i32, i32
  }
  func.func @transform_3(%arg0: i32) -> (i32, i32) {
    %c0_i32 = arith.constant 0 : i32
    %c0_i32_0 = arith.constant 0 : i32
    %c0_i32_1 = arith.constant 0 : i32
    return %c0_i32, %c0_i32_0 : i32, i32
  }
  func.func @transform_4(%arg0: i32) -> (i32, i32) {
    %c0_i32 = arith.constant 0 : i32
    %c0_i32_0 = arith.constant 0 : i32
    return %arg0, %c0_i32 : i32, i32
  }
}

</mosaic_0001>

<llo_original>
// kernel: tpu_custom_call.1
$region0: #{tpu_custom_call.1}
  #allocation0 [shape = 'u32[]', space=smem, size = 0x4, offset = 0x4, fixed_abs, tag = 'smem constant byte address 0x4 - core index']
  #allocation1 [shape = 'u32[144,128]{1,0:T(1,128)}', space=vmem, size = 0x12000, scoped, tag = 'internal scratch']
  %s0 = inlined_call_operand.vmem [shape: f32[16,32], index: 0, kind: input, shape index: {}]
  %s1 = inlined_call_operand.vmem [shape: f32[128,32], index: 1, kind: input, shape index: {}]
  %s2 = inlined_call_operand.vmem [shape: f32[16,8,1], index: 2, kind: input, shape index: {}]
  %s3 = inlined_call_operand.vmem [shape: f32[32,34], index: 3, kind: input, shape index: {}]
  %s4 = inlined_call_operand.hbm [shape: f32[16,32], index: 4, kind: output, shape index: {}]
  %s5 = sld [smem:[#allocation0]]
  $region49: #{tpu_custom_call.1} parent=0
    _
  %s7 = ssub.s32 1, %s5
  %s8 = scalar_select 0, %s7, %s5
  $region1: #{tpu_custom_call.1} parent=0
    #allocation2 [shape = 'u8[8192]{0}', space=vmem, size = 0x2000, scoped, tag = 'output window, operand 0']
    #allocation3 [shape = 's32[2]{0}', space=sflag, size = 0x8, scoped, tag = 'scoped memory for tpu_custom_call.1']
    %9 = vsyncpa [#allocation3], 0
    %s10 = scalar_lea.sflag [#allocation3], 1
    %11 = vsyncpa %s10, 0
    loop: start=0, step=1, limit=4
    $region2: #{tpu_custom_call.1} parent=1 // loop_pre_header
      _
    $region3: #{tpu_custom_call.1} parent=1 // loop_header
      %s13 = sphi 0, %s17
      %p14 = scmp.ge.s32.totalorder %s13, 4
      %s23 = sphi 0, %s25
      %s26 = sphi 0, %s23
      %s27 = sphi 0, %s26
      %s43 = sphi 0, %s27
      %s49 = sphi 0, %s51
      %s52 = sphi 0, %s49
      %s53 = sphi 0, %s52
      %s69 = sphi 0, %s53
      %s75 = sphi 0, %s77
      %s78 = sphi 0, %s75
      %s79 = sphi 0, %s78
      %s95 = sphi 0, %s79
      %s99 = sphi 0, %s99
      %s101 = sphi 0, %s99
      %s102 = sphi 0, %s101
      %s116 = sphi 0, %s102
      %s122 = sphi 0, %s124
      %s125 = sphi 0, %s122
      %s126 = sphi 0, %s125
      %s142 = sphi 0, %s126
    $region4: #{tpu_custom_call.1} parent=1 // loop_header_branch
      %16 = sbr.rel (%p14) target = $region8
    $region5: #{tpu_custom_call.1} parent=1 // loop_body
      %s18 = ssub.s32 %s13, 1
      %s19 = ssub.s32 %s13, 2
      %s20 = sadd.s32 %s13, 1
      %s21 = ssub.s32 %s13, %s20
      %p22 = scmp.eq.s32.totalorder %s21, 0
      %s24 = sadd.s32 %s23, 1
      %s25 = scalar_select %p22, %s23, %s24
      %p28 = pneg %p22
      %p29 = scmp.eq.s32.totalorder %s13, 1
      %p30 = por %p28, %p29
      %p31 = scmp.ne.s32.totalorder %s23, %s26
      %p32 = scmp.eq.s32.totalorder %s13, 0
      %p33 = por %p31, %p32
      %p34 = scmp.ne.s32.totalorder %s23, %s26
      %p35 = scmp.eq.s32.totalorder %s18, 1
      %p36 = por %p34, %p35
      %p37 = scmp.ne.s32.totalorder %s26, %s27
      %p38 = scmp.eq.s32.totalorder %s18, 0
      %p39 = por %p37, %p38
      %p40 = scmp.ne.s32.totalorder %s26, %s27
      %p41 = scmp.eq.s32.totalorder %s19, 1
      %p42 = por %p40, %p41
      %p44 = scmp.ne.s32.totalorder %s27, %s43
      %p45 = scmp.eq.s32.totalorder %s19, 0
      %p46 = por %p44, %p45
      %s47 = ssub.s32 %s13, %s20
      %p48 = scmp.eq.s32.totalorder %s47, 0
      %s50 = sadd.s32 %s49, 1
      %s51 = scalar_select %p48, %s49, %s50
      %p54 = pneg %p48
      %p55 = scmp.eq.s32.totalorder %s13, 1
      %p56 = por %p54, %p55
      %p57 = scmp.ne.s32.totalorder %s49, %s52
      %p58 = scmp.eq.s32.totalorder %s13, 0
      %p59 = por %p57, %p58
      %p60 = scmp.ne.s32.totalorder %s49, %s52
      %p61 = scmp.eq.s32.totalorder %s18, 1
      %p62 = por %p60, %p61
      %p63 = scmp.ne.s32.totalorder %s52, %s53
      %p64 = scmp.eq.s32.totalorder %s18, 0
      %p65 = por %p63, %p64
      %p66 = scmp.ne.s32.totalorder %s52, %s53
      %p67 = scmp.eq.s32.totalorder %s19, 1
      %p68 = por %p66, %p67
      %p70 = scmp.ne.s32.totalorder %s53, %s69
      %p71 = scmp.eq.s32.totalorder %s19, 0
      %p72 = por %p70, %p71
      %s73 = ssub.s32 %s13, %s20
      %p74 = scmp.eq.s32.totalorder %s73, 0
      %s76 = sadd.s32 %s75, 1
      %s77 = scalar_select %p74, %s75, %s76
      %p80 = pneg %p74
      %p81 = scmp.eq.s32.totalorder %s13, 1
      %p82 = por %p80, %p81
      %p83 = scmp.ne.s32.totalorder %s75, %s78
      %p84 = scmp.eq.s32.totalorder %s13, 0
      %p85 = por %p83, %p84
      %p86 = scmp.ne.s32.totalorder %s75, %s78
      %p87 = scmp.eq.s32.totalorder %s18, 1
      %p88 = por %p86, %p87
      %p89 = scmp.ne.s32.totalorder %s78, %s79
      %p90 = scmp.eq.s32.totalorder %s18, 0
      %p91 = por %p89, %p90
      %p92 = scmp.ne.s32.totalorder %s78, %s79
      %p93 = scmp.eq.s32.totalorder %s19, 1
      %p94 = por %p92, %p93
      %p96 = scmp.ne.s32.totalorder %s79, %s95
      %p97 = scmp.eq.s32.totalorder %s19, 0
      %p98 = por %p96, %p97
      %s100 = sadd.s32 %s99, 1
      %p103 = scmp.eq.s32.totalorder %s13, 1
      %p104 = scmp.ne.s32.totalorder %s99, %s101
      %p105 = scmp.eq.s32.totalorder %s13, 0
      %p106 = por %p104, %p105
      %p107 = scmp.ne.s32.totalorder %s99, %s101
      %p108 = scmp.eq.s32.totalorder %s18, 1
      %p109 = por %p107, %p108
      %p110 = scmp.ne.s32.totalorder %s101, %s102
      %p111 = scmp.eq.s32.totalorder %s18, 0
      %p112 = por %p110, %p111
      %p113 = scmp.ne.s32.totalorder %s101, %s102
      %p114 = scmp.eq.s32.totalorder %s19, 1
      %p115 = por %p113, %p114
      %p117 = scmp.ne.s32.totalorder %s102, %s116
      %p118 = scmp.eq.s32.totalorder %s19, 0
      %p119 = por %p117, %p118
      %s120 = ssub.s32 %s13, %s20
      %p121 = scmp.eq.s32.totalorder %s120, 0
      %s123 = sadd.s32 %s122, 1
      %s124 = scalar_select %p121, %s122, %s123
      %p127 = pneg %p121
      %p128 = scmp.eq.s32.totalorder %s13, 1
      %p129 = por %p127, %p128
      %p130 = scmp.ne.s32.totalorder %s122, %s125
      %p131 = scmp.eq.s32.totalorder %s13, 0
      %p132 = por %p130, %p131
      %p133 = scmp.ne.s32.totalorder %s122, %s125
      %p134 = scmp.eq.s32.totalorder %s18, 1
      %p135 = por %p133, %p134
      %p136 = scmp.ne.s32.totalorder %s125, %s126
      %p137 = scmp.eq.s32.totalorder %s18, 0
      %p138 = por %p136, %p137
      %p139 = scmp.ne.s32.totalorder %s125, %s126
      %p140 = scmp.eq.s32.totalorder %s19, 1
      %p141 = por %p139, %p140
      %p143 = scmp.ne.s32.totalorder %s126, %s142
      %p144 = scmp.eq.s32.totalorder %s19, 0
      %p145 = por %p143, %p144
      %p146 = scmp.le.s32.totalorder 1, %s13
      %p147 = scmp.lt.s32.totalorder %s13, 3
      %p148 = pnand %p146, %p147
      %p149 = pneg %p148
      // Predicated region
      $region9: #{tpu_custom_call.1} parent=5 // pred_check
        _
      $region10: #{tpu_custom_call.1} parent=5 // pred_check_branch
        %151 = sbr.rel (%p148) target = $region12
      $region11: #{tpu_custom_call.1} parent=5 // pred_region
        %s152 = ssub.s32 %s13, 1
        // Predicated region
        $region13: #{tpu_custom_call.1} parent=11 // pred_check
          %p153 = pneg %p112
        $region14: #{tpu_custom_call.1} parent=11 // pred_check_branch
          %155 = sbr.rel (%p153) target = $region16
        $region15: #{tpu_custom_call.1} parent=11 // pred_region
          _
        $region16: #{tpu_custom_call.1} parent=11 // pred_fallthru
          _
      $region12: #{tpu_custom_call.1} parent=5 // pred_fallthru
        _
      %p156 = scmp.lt.s32.totalorder %s13, 2
      // Predicated region
      $region17: #{tpu_custom_call.1} parent=5 // pred_check
        %p157 = pneg %p156
      $region18: #{tpu_custom_call.1} parent=5 // pred_check_branch
        %159 = sbr.rel (%p157) target = $region20
      $region19: #{tpu_custom_call.1} parent=5 // pred_region
        // Predicated region
        $region21: #{tpu_custom_call.1} parent=19 // pred_check
          %p160 = pneg %p33
        $region22: #{tpu_custom_call.1} parent=19 // pred_check_branch
          %162 = sbr.rel (%p160) target = $region24
        $region23: #{tpu_custom_call.1} parent=19 // pred_region
          %p163 = scmp.lt.s32.totalorder %s13, 1
          %s164 = scalar_select %p163, %s13, 1
          %s165 = smul.addr %s164, 8
          %s166 = scalar_lea.vmem %s0, %s165
        $region24: #{tpu_custom_call.1} parent=19 // pred_fallthru
          _
        // Predicated region
        $region25: #{tpu_custom_call.1} parent=19 // pred_check
          %p167 = pneg %p59
        $region26: #{tpu_custom_call.1} parent=19 // pred_check_branch
          %169 = sbr.rel (%p167) target = $region28
        $region27: #{tpu_custom_call.1} parent=19 // pred_region
          %s170 = smul.u32 8, %s13
          %p171 = scmp.lt.s32.totalorder %s170, 15
          %s172 = scalar_select %p171, %s170, 15
          %s173 = smul.addr %s172, 8
          %s174 = scalar_lea.vmem %s1, %s173
          %s175 = smul.u32 8, %s13
        $region28: #{tpu_custom_call.1} parent=19 // pred_fallthru
          _
        // Predicated region
        $region29: #{tpu_custom_call.1} parent=19 // pred_check
          %p176 = pneg %p85
        $region30: #{tpu_custom_call.1} parent=19 // pred_check_branch
          %178 = sbr.rel (%p176) target = $region32
        $region31: #{tpu_custom_call.1} parent=19 // pred_region
          %s179 = smul.u32 8, %s13
          %p180 = scmp.lt.s32.totalorder %s179, 15
          %s181 = scalar_select %p180, %s179, 15
          %s182 = smul.addr %s181, 8
          %s183 = scalar_lea.vmem %s2, %s182
          %s184 = smul.u32 8, %s13
        $region32: #{tpu_custom_call.1} parent=19 // pred_fallthru
          _
      $region20: #{tpu_custom_call.1} parent=5 // pred_fallthru
        _
      %p185 = scmp.le.s32.totalorder 1, %s13
      %p186 = scmp.lt.s32.totalorder %s13, 3
      %p187 = pnand %p185, %p186
      %p188 = pneg %p187
      // Predicated region
      $region33: #{tpu_custom_call.1} parent=5 // pred_check
        _
      $region34: #{tpu_custom_call.1} parent=5 // pred_check_branch
        %190 = sbr.rel (%p187) target = $region36
      $region35: #{tpu_custom_call.1} parent=5 // pred_region
        %s191 = ssub.s32 %s13, 1
        %p192 = scmp.lt.s32.totalorder %s18, 1
        %s193 = scalar_select %p192, %s18, 1
        %s194 = smul.addr %s193, 8
        %s195 = scalar_lea.vmem %s0, %s194
        %p196 = pneg %p39
        %p197 = pneg %p36
        %s198 = smul.u32 8, %s18
        %p199 = scmp.lt.s32.totalorder %s198, 15
        %s200 = scalar_select %p199, %s198, 15
        %s201 = smul.addr %s200, 8
        %s202 = scalar_lea.vmem %s1, %s201
        %p203 = pneg %p65
        %p204 = pneg %p62
        %s205 = smul.u32 8, %s18
        %p206 = scmp.lt.s32.totalorder %s205, 15
        %s207 = scalar_select %p206, %s205, 15
        %s208 = smul.addr %s207, 8
        %s209 = scalar_lea.vmem %s2, %s208
        %p210 = pneg %p91
        %p211 = pneg %p88
        %p212 = pneg %p112
        %p213 = pneg %p109
        %p214 = pneg %p138
        %p215 = pneg %p135
        %s216 = sand.u32 %s125, 1
        %s217 = scalar_lea.sflag [#allocation3], %s216
        %s218 = sand.u32 %s125, 1
        %s219 = smul.addr %s218, 8
        %s220 = scalar_lea.vmem [#allocation2], %s219
        %p221 = scmp.lt.s32.totalorder %s18, 1
        %s222 = scalar_select %p221, %s18, 1
        %s223 = smul.addr %s222, 8
        %s224 = scalar_lea.vmem %s0, %s223
        %s225 = smul.u32 8, %s18
        %p226 = scmp.lt.s32.totalorder %s225, 15
        %s227 = scalar_select %p226, %s225, 15
        %s228 = smul.addr %s227, 8
        %s229 = scalar_lea.vmem %s1, %s228
        %s230 = smul.u32 8, %s18
        %s231 = smul.u32 8, %s18
        %p232 = scmp.lt.s32.totalorder %s231, 15
        %s233 = scalar_select %p232, %s231, 15
        %s234 = smul.addr %s233, 8
        %s235 = scalar_lea.vmem %s2, %s234
        %s236 = smul.u32 8, %s18
        %v237 = vld [vmem:[%s3] sm:$0xff]
        %v238 = vld [vmem:[%s3 + $0x8] sm:$0xff]
        %v239 = vld [vmem:[%s3 + $0x10] sm:$0xff]
        %v240 = vld [vmem:[%s3 + $0x18] sm:$0xff]
        %v241 = vld [vmem:[%s224] sm:$0xff]
        %v242 = vld [vmem:[%s229] sm:$0xff]
        %v243 = vld [vmem:[%s229 + $0x8] sm:$0xff]
        %v244 = vld [vmem:[%s229 + $0x10] sm:$0xff]
        %v245 = vld [vmem:[%s229 + $0x18] sm:$0xff]
        %v246 = vld [vmem:[%s229 + $0x20] sm:$0xff]
        %v247 = vld [vmem:[%s229 + $0x28] sm:$0xff]
        %v248 = vld [vmem:[%s229 + $0x30] sm:$0xff]
        %v249 = vld [vmem:[%s229 + $0x38] sm:$0xff]
        %v250 = vld [vmem:[%s235] sm:$0xff]
        %v251 = vld [vmem:[%s235 + $0x8] sm:$0xff]
        %v252 = vld [vmem:[%s235 + $0x10] sm:$0xff]
        %v253 = vld [vmem:[%s235 + $0x18] sm:$0xff]
        %v254 = vld [vmem:[%s235 + $0x20] sm:$0xff]
        %v255 = vld [vmem:[%s235 + $0x28] sm:$0xff]
        %v256 = vld [vmem:[%s235 + $0x30] sm:$0xff]
        %v257 = vld [vmem:[%s235 + $0x38] sm:$0xff]
        %vm258 = vcmask 261120
        %v260 = vsel %vm258, %v241, 0
        %262 = vmatprep.subr.mxu0 0.0
        %263 = vmatpush1.msra.mxu0 0.0
        %264 = vmatprep.subr.mxu0 0.0
        %265 = vmatpush1.msra.mxu0 0.0
        %266 = vmatprep.subr.mxu0 0.0
        %267 = vmatpush1.msra.mxu0 0.0
        %268 = vmatprep.subr.mxu0 0.0
        %269 = vmatpush1.msra.mxu0 0.0
        %270 = vmatprep.subr.mxu0 0.0
        %271 = vmatpush1.msra.mxu0 0.0
        %272 = vmatprep.subr.mxu0 0.0
        %273 = vmatpush1.msra.mxu0 0.0
        %274 = vmatprep.subr.mxu0 0.0
        %275 = vmatpush1.msra.mxu0 0.0
        %276 = vmatprep.subr.mxu0 0.0
        %277 = vmatpush1.msra.mxu0 0.0
        %278 = vmatprep.subr.mxu0 0.0
        %279 = vmatpush1.msra.mxu0 0.0
        %280 = vmatprep.subr.mxu0 0.0
        %281 = vmatpush1.msra.mxu0 0.0
        %282 = vmatprep.subr.mxu0 0.0
        %283 = vmatpush1.msra.mxu0 0.0
        %284 = vmatprep.subr.mxu0 0.0
        %285 = vmatpush1.msra.mxu0 0.0
        %286 = vmatprep.subr.mxu0 0.0
        %287 = vmatpush1.msra.mxu0 %v240
        %288 = vmatprep.subr.mxu0 0.0
        %289 = vmatpush1.msra.mxu0 %v239
        %290 = vmatprep.subr.mxu0 0.0
        %291 = vmatpush1.msra.mxu0 %v238
        %292 = vmatprep.subr.mxu0 0.0
        %293 = vmatpush1.msra.mxu0 %v237
        %294 = vmatprep.subr.mxu0 0.0
        %295 = vmatpush2.msra.mxu0 0.0
        %296 = vmatprep.subr.mxu0 0.0
        %297 = vmatpush2.msra.mxu0 0.0
        %298 = vmatprep.subr.mxu0 0.0
        %299 = vmatpush2.msra.mxu0 0.0
        %300 = vmatprep.subr.mxu0 0.0
        %301 = vmatpush2.msra.mxu0 0.0
        %302 = vmatprep.subr.mxu0 0.0
        %303 = vmatpush2.msra.mxu0 0.0
        %304 = vmatprep.subr.mxu0 0.0
        %305 = vmatpush2.msra.mxu0 0.0
        %306 = vmatprep.subr.mxu0 0.0
        %307 = vmatpush2.msra.mxu0 0.0
        %308 = vmatprep.subr.mxu0 0.0
        %309 = vmatpush2.msra.mxu0 0.0
        %310 = vmatprep.subr.mxu0 0.0
        %311 = vmatpush2.msra.mxu0 0.0
        %312 = vmatprep.subr.mxu0 0.0
        %313 = vmatpush2.msra.mxu0 0.0
        %314 = vmatprep.subr.mxu0 0.0
        %315 = vmatpush2.msra.mxu0 0.0
        %316 = vmatprep.subr.mxu0 0.0
        %317 = vmatpush2.msra.mxu0 0.0
        %318 = vmatprep.subr.mxu0 0.0
        %319 = vmatpush2.msra.mxu0 0.0
        %320 = vmatprep.subr.mxu0 0.0
        %321 = vmatpush2.msra.mxu0 0.0
        %322 = vmatprep.subr.mxu0 0.0
        %323 = vmatpush2.msra.mxu0 0.0
        %324 = vmatprep.subr.mxu0 0.0
        %325 = vmatpush2.msra.mxu0 0.0
        %326 = vmatprep.mubr.f32.mxu0 0.0
        %327 = vmatmul.mubr.f32.gmra.mxu0 %v260
        %v328 = vpop.f32.mrf.mxu0
        %v329 = vadd.f32 0.0, %v328
        %v330 = vpop.f32.mrf.mxu0
        %331 = vdwg.mxu0
        %v333 = vsel %vm258, %v242, 0
        %v336 = vsel %vm258, %v243, 0
        %v339 = vsel %vm258, %v244, 0
        %v342 = vsel %vm258, %v245, 0
        %v345 = vsel %vm258, %v246, 0
        %v348 = vsel %vm258, %v247, 0
        %v351 = vsel %vm258, %v248, 0
        %v354 = vsel %vm258, %v249, 0
        %356 = vmatprep.subr.mxu0 0.0
        %357 = vmatpush1.msra.mxu0 0.0
        %358 = vmatprep.subr.mxu0 0.0
        %359 = vmatpush1.msra.mxu0 0.0
        %360 = vmatprep.subr.mxu0 0.0
        %361 = vmatpush1.msra.mxu0 0.0
        %362 = vmatprep.subr.mxu0 0.0
        %363 = vmatpush1.msra.mxu0 0.0
        %364 = vmatprep.subr.mxu0 0.0
        %365 = vmatpush1.msra.mxu0 0.0
        %366 = vmatprep.subr.mxu0 0.0
        %367 = vmatpush1.msra.mxu0 0.0
        %368 = vmatprep.subr.mxu0 0.0
        %369 = vmatpush1.msra.mxu0 0.0
        %370 = vmatprep.subr.mxu0 0.0
        %371 = vmatpush1.msra.mxu0 0.0
        %372 = vmatprep.subr.mxu0 0.0
        %373 = vmatpush1.msra.mxu0 0.0
        %374 = vmatprep.subr.mxu0 0.0
        %375 = vmatpush1.msra.mxu0 0.0
        %376 = vmatprep.subr.mxu0 0.0
        %377 = vmatpush1.msra.mxu0 0.0
        %378 = vmatprep.subr.mxu0 0.0
        %379 = vmatpush1.msra.mxu0 0.0
        %380 = vmatprep.subr.mxu0 0.0
        %381 = vmatpush1.msra.mxu0 %v240
        %382 = vmatprep.subr.mxu0 0.0
        %383 = vmatpush1.msra.mxu0 %v239
        %384 = vmatprep.subr.mxu0 0.0
        %385 = vmatpush1.msra.mxu0 %v238
        %386 = vmatprep.subr.mxu0 0.0
        %387 = vmatpush1.msra.mxu0 %v237
        %388 = vmatprep.subr.mxu0 0.0
        %389 = vmatpush2.msra.mxu0 0.0
        %390 = vmatprep.subr.mxu0 0.0
        %391 = vmatpush2.msra.mxu0 0.0
        %392 = vmatprep.subr.mxu0 0.0
        %393 = vmatpush2.msra.mxu0 0.0
        %394 = vmatprep.subr.mxu0 0.0
        %395 = vmatpush2.msra.mxu0 0.0
        %396 = vmatprep.subr.mxu0 0.0
        %397 = vmatpush2.msra.mxu0 0.0
        %398 = vmatprep.subr.mxu0 0.0
        %399 = vmatpush2.msra.mxu0 0.0
        %400 = vmatprep.subr.mxu0 0.0
        %401 = vmatpush2.msra.mxu0 0.0
        %402 = vmatprep.subr.mxu0 0.0
        %403 = vmatpush2.msra.mxu0 0.0
        %404 = vmatprep.subr.mxu0 0.0
        %405 = vmatpush2.msra.mxu0 0.0
        %406 = vmatprep.subr.mxu0 0.0
        %407 = vmatpush2.msra.mxu0 0.0
        %408 = vmatprep.subr.mxu0 0.0
        %409 = vmatpush2.msra.mxu0 0.0
        %410 = vmatprep.subr.mxu0 0.0
        %411 = vmatpush2.msra.mxu0 0.0
        %412 = vmatprep.subr.mxu0 0.0
        %413 = vmatpush2.msra.mxu0 0.0
        %414 = vmatprep.subr.mxu0 0.0
        %415 = vmatpush2.msra.mxu0 0.0
        %416 = vmatprep.subr.mxu0 0.0
        %417 = vmatpush2.msra.mxu0 0.0
        %418 = vmatprep.subr.mxu0 0.0
        %419 = vmatpush2.msra.mxu0 0.0
        %420 = vmatprep.mubr.f32.mxu0 0.0
        %421 = vmatmul.mubr.f32.gmra.mxu0 %v333
        %v422 = vpop.f32.mrf.mxu0
        %v423 = vadd.f32 0.0, %v422
        %v424 = vpop.f32.mrf.mxu0
        %425 = vmatprep.mubr.f32.mxu0 0.0
        %426 = vmatmul.mubr.f32.gmra.mxu0 %v336
        %v427 = vpop.f32.mrf.mxu0
        %v428 = vadd.f32 0.0, %v427
        %v429 = vpop.f32.mrf.mxu0
        %430 = vmatprep.mubr.f32.mxu0 0.0
        %431 = vmatmul.mubr.f32.gmra.mxu0 %v339
        %v432 = vpop.f32.mrf.mxu0
        %v433 = vadd.f32 0.0, %v432
        %v434 = vpop.f32.mrf.mxu0
        %435 = vmatprep.mubr.f32.mxu0 0.0
        %436 = vmatmul.mubr.f32.gmra.mxu0 %v342
        %v437 = vpop.f32.mrf.mxu0
        %v438 = vadd.f32 0.0, %v437
        %v439 = vpop.f32.mrf.mxu0
        %440 = vmatprep.mubr.f32.mxu0 0.0
        %441 = vmatmul.mubr.f32.gmra.mxu0 %v345
        %v442 = vpop.f32.mrf.mxu0
        %v443 = vadd.f32 0.0, %v442
        %v444 = vpop.f32.mrf.mxu0
        %445 = vmatprep.mubr.f32.mxu0 0.0
        %446 = vmatmul.mubr.f32.gmra.mxu0 %v348
        %v447 = vpop.f32.mrf.mxu0
        %v448 = vadd.f32 0.0, %v447
        %v449 = vpop.f32.mrf.mxu0
        %450 = vmatprep.mubr.f32.mxu0 0.0
        %451 = vmatmul.mubr.f32.gmra.mxu0 %v351
        %v452 = vpop.f32.mrf.mxu0
        %v453 = vadd.f32 0.0, %v452
        %v454 = vpop.f32.mrf.mxu0
        %455 = vmatprep.mubr.f32.mxu0 0.0
        %456 = vmatmul.mubr.f32.gmra.mxu0 %v354
        %v457 = vpop.f32.mrf.mxu0
        %v458 = vadd.f32 0.0, %v457
        %v459 = vpop.f32.mrf.mxu0
        %460 = vdwg.mxu0
        %v462 = vcombine.high %v329, %v329
        %v464 = vunpack.c.l.s4 1966171168
        %v465 = vunpack.c.0.s8 %v464
        %v466 = vlaneseq
        %v467 = vshrl.u32 %v466, 7
        %v468 = vsub.s32 %v465, %v467
        %v469 = vrot.slane %v329, %v468
        %v471 = vunpack.c.l.s4 1966171168
        %v472 = vunpack.c.0.s8 %v471
        %v473 = vlaneseq
        %v474 = vshrl.u32 %v473, 7
        %v475 = vsub.s32 %v472, %v474
        %v476 = vrot.slane %v462, %v475
        %v477 = vcombine.high %v469, %v469
        %v478 = vcombine.high %v476, %v476
        %v480 = vunpack.c.l.s4 1966171168
        %v481 = vunpack.c.0.s8 %v480
        %v482 = vlaneseq
        %v483 = vshrl.u32 %v482, 7
        %v484 = vsub.s32 %v481, %v483
        %v485 = vrot.slane %v469, %v484
        %v487 = vunpack.c.l.s4 1966171168
        %v488 = vunpack.c.0.s8 %v487
        %v489 = vlaneseq
        %v490 = vshrl.u32 %v489, 7
        %v491 = vsub.s32 %v488, %v490
        %v492 = vrot.slane %v476, %v491
        %v494 = vunpack.c.l.s4 1966171168
        %v495 = vunpack.c.0.s8 %v494
        %v496 = vlaneseq
        %v497 = vshrl.u32 %v496, 7
        %v498 = vsub.s32 %v495, %v497
        %v499 = vrot.slane %v477, %v498
        %v501 = vunpack.c.l.s4 1966171168
        %v502 = vunpack.c.0.s8 %v501
        %v503 = vlaneseq
        %v504 = vshrl.u32 %v503, 7
        %v505 = vsub.s32 %v502, %v504
        %v506 = vrot.slane %v478, %v505
        %v507 = vcombine.high %v485, %v485
        %v508 = vcombine.high %v492, %v492
        %v509 = vcombine.high %v499, %v499
        %v510 = vcombine.high %v506, %v506
        %v511 = vlaneseq
        %v512 = vshrl.u32 %v511, 7
        %v513 = vsub.s32 0, %v512
        %v514 = vrot.slane %v485, %v513
        %v515 = vlaneseq
        %v516 = vshrl.u32 %v515, 7
        %v517 = vsub.s32 0, %v516
        %v518 = vrot.slane %v499, %v517
        %v519 = vlaneseq
        %v520 = vshrl.u32 %v519, 7
        %v521 = vsub.s32 0, %v520
        %v522 = vrot.slane %v507, %v521
        %v523 = vlaneseq
        %v524 = vshrl.u32 %v523, 7
        %v525 = vsub.s32 0, %v524
        %v526 = vrot.slane %v509, %v525
        %v527 = vlaneseq
        %v528 = vshrl.u32 %v527, 7
        %v529 = vsub.s32 0, %v528
        %v530 = vrot.slane %v492, %v529
        %v531 = vlaneseq
        %v532 = vshrl.u32 %v531, 7
        %v533 = vsub.s32 0, %v532
        %v534 = vrot.slane %v506, %v533
        %v535 = vlaneseq
        %v536 = vshrl.u32 %v535, 7
        %v537 = vsub.s32 0, %v536
        %v538 = vrot.slane %v508, %v537
        %v539 = vlaneseq
        %v540 = vshrl.u32 %v539, 7
        %v541 = vsub.s32 0, %v540
        %v542 = vrot.slane %v510, %v541
        %559 = vrot.lane.b32.xlu0 %v423, 127
        %v560 = vpop.permute.xlu0 %559
        %561 = vrot.lane.b32.xlu0 %v428, 127
        %v562 = vpop.permute.xlu0 %561
        %563 = vrot.lane.b32.xlu0 %v433, 127
        %v564 = vpop.permute.xlu0 %563
        %565 = vrot.lane.b32.xlu0 %v438, 127
        %v566 = vpop.permute.xlu0 %565
        %567 = vrot.lane.b32.xlu0 %v443, 127
        %v568 = vpop.permute.xlu0 %567
        %569 = vrot.lane.b32.xlu0 %v448, 127
        %v570 = vpop.permute.xlu0 %569
        %571 = vrot.lane.b32.xlu0 %v453, 127
        %v572 = vpop.permute.xlu0 %571
        %573 = vrot.lane.b32.xlu0 %v458, 127
        %v574 = vpop.permute.xlu0 %573
        %v583 = vadd.f32 %v514, %v560
        %v584 = vadd.f32 %v518, %v562
        %v585 = vadd.f32 %v522, %v564
        %v586 = vadd.f32 %v526, %v566
        %v587 = vadd.f32 %v530, %v568
        %v588 = vadd.f32 %v534, %v570
        %v589 = vadd.f32 %v538, %v572
        %v590 = vadd.f32 %v542, %v574
        %vm591 = vcmp.gt.f32.partialorder %v583, 0.0
        %vm592 = vcmp.gt.f32.partialorder %v584, 0.0
        %vm593 = vcmp.gt.f32.partialorder %v585, 0.0
        %vm594 = vcmp.gt.f32.partialorder %v586, 0.0
        %vm595 = vcmp.gt.f32.partialorder %v587, 0.0
        %vm596 = vcmp.gt.f32.partialorder %v588, 0.0
        %vm597 = vcmp.gt.f32.partialorder %v589, 0.0
        %vm598 = vcmp.gt.f32.partialorder %v590, 0.0
        %v599 = vmul.f32 %v583, 0.2
        %v600 = vmul.f32 %v584, 0.2
        %v601 = vmul.f32 %v585, 0.2
        %v602 = vmul.f32 %v586, 0.2
        %v603 = vmul.f32 %v587, 0.2
        %v604 = vmul.f32 %v588, 0.2
        %v605 = vmul.f32 %v589, 0.2
        %v606 = vmul.f32 %v590, 0.2
        %v607 = vsel %vm591, %v583, %v599
        %v608 = vsel %vm592, %v584, %v600
        %v609 = vsel %vm593, %v585, %v601
        %v610 = vsel %vm594, %v586, %v602
        %v611 = vsel %vm595, %v587, %v603
        %v612 = vsel %vm596, %v588, %v604
        %v613 = vsel %vm597, %v589, %v605
        %v614 = vsel %vm598, %v590, %v606
        %vm615 = vcmp.gt.f32.partialorder %v250, 0.0
        %vm616 = vcmp.gt.f32.partialorder %v251, 0.0
        %vm617 = vcmp.gt.f32.partialorder %v252, 0.0
        %vm618 = vcmp.gt.f32.partialorder %v253, 0.0
        %vm619 = vcmp.gt.f32.partialorder %v254, 0.0
        %vm620 = vcmp.gt.f32.partialorder %v255, 0.0
        %vm621 = vcmp.gt.f32.partialorder %v256, 0.0
        %vm622 = vcmp.gt.f32.partialorder %v257, 0.0
        %631 = vrot.lane.b32.xlu0 %v607, 96
        %v632 = vpop.permute.xlu0 %631
        %633 = vrot.lane.b32.xlu0 %v608, 96
        %v634 = vpop.permute.xlu0 %633
        %635 = vrot.lane.b32.xlu0 %v609, 96
        %v636 = vpop.permute.xlu0 %635
        %637 = vrot.lane.b32.xlu0 %v610, 96
        %v638 = vpop.permute.xlu0 %637
        %639 = vrot.lane.b32.xlu0 %v611, 96
        %v640 = vpop.permute.xlu0 %639
        %641 = vrot.lane.b32.xlu0 %v612, 96
        %v642 = vpop.permute.xlu0 %641
        %643 = vrot.lane.b32.xlu0 %v613, 96
        %v644 = vpop.permute.xlu0 %643
        %645 = vrot.lane.b32.xlu0 %v614, 96
        %v646 = vpop.permute.xlu0 %645
        %v655 = vsel %vm615, %v632, -9e+15
        %v656 = vsel %vm616, %v634, -9e+15
        %v657 = vsel %vm617, %v636, -9e+15
        %v658 = vsel %vm618, %v638, -9e+15
        %v659 = vsel %vm619, %v640, -9e+15
        %v660 = vsel %vm620, %v642, -9e+15
        %v661 = vsel %vm621, %v644, -9e+15
        %v662 = vsel %vm622, %v646, -9e+15
        %vm663 = vcmask 7168
        %v664 = vsel %vm663, %v655, -inf
        %v665 = vrot.slane %v664, 4
        %v666 = vmax.f32 %v664, %v665
        %v667 = vrot.slane %v666, 2
        %v668 = vmax.f32 %v666, %v667
        %v669 = vrot.slane %v668, 1
        %v670 = vmax.f32 %v668, %v669
        %v671 = vsel %vm663, %v656, -inf
        %v672 = vrot.slane %v671, 4
        %v673 = vmax.f32 %v671, %v672
        %v674 = vrot.slane %v673, 2
        %v675 = vmax.f32 %v673, %v674
        %v676 = vrot.slane %v675, 1
        %v677 = vmax.f32 %v675, %v676
        %v678 = vsel %vm663, %v657, -inf
        %v679 = vrot.slane %v678, 4
        %v680 = vmax.f32 %v678, %v679
        %v681 = vrot.slane %v680, 2
        %v682 = vmax.f32 %v680, %v681
        %v683 = vrot.slane %v682, 1
        %v684 = vmax.f32 %v682, %v683
        %v685 = vsel %vm663, %v658, -inf
        %v686 = vrot.slane %v685, 4
        %v687 = vmax.f32 %v685, %v686
        %v688 = vrot.slane %v687, 2
        %v689 = vmax.f32 %v687, %v688
        %v690 = vrot.slane %v689, 1
        %v691 = vmax.f32 %v689, %v690
        %v692 = vsel %vm663, %v659, -inf
        %v693 = vrot.slane %v692, 4
        %v694 = vmax.f32 %v692, %v693
        %v695 = vrot.slane %v694, 2
        %v696 = vmax.f32 %v694, %v695
        %v697 = vrot.slane %v696, 1
        %v698 = vmax.f32 %v696, %v697
        %v699 = vsel %vm663, %v660, -inf
        %v700 = vrot.slane %v699, 4
        %v701 = vmax.f32 %v699, %v700
        %v702 = vrot.slane %v701, 2
        %v703 = vmax.f32 %v701, %v702
        %v704 = vrot.slane %v703, 1
        %v705 = vmax.f32 %v703, %v704
        %v706 = vsel %vm663, %v661, -inf
        %v707 = vrot.slane %v706, 4
        %v708 = vmax.f32 %v706, %v707
        %v709 = vrot.slane %v708, 2
        %v710 = vmax.f32 %v708, %v709
        %v711 = vrot.slane %v710, 1
        %v712 = vmax.f32 %v710, %v711
        %v713 = vsel %vm663, %v662, -inf
        %v714 = vrot.slane %v713, 4
        %v715 = vmax.f32 %v713, %v714
        %v716 = vrot.slane %v715, 2
        %v717 = vmax.f32 %v715, %v716
        %v718 = vrot.slane %v717, 1
        %v719 = vmax.f32 %v717, %v718
        %v720 = vsub.f32 %v655, %v670
        %v721 = vsub.f32 %v656, %v677
        %v722 = vsub.f32 %v657, %v684
        %v723 = vsub.f32 %v658, %v691
        %v724 = vsub.f32 %v659, %v698
        %v725 = vsub.f32 %v660, %v705
        %v726 = vsub.f32 %v661, %v712
        %v727 = vsub.f32 %v662, %v719
        %v728 = vmul.f32 %v720, 1.442695
        %v729 = vpow.pop %v728
        %v730 = vmul.f32 %v721, 1.442695
        %v731 = vpow.pop %v730
        %v732 = vmul.f32 %v722, 1.442695
        %v733 = vpow.pop %v732
        %v734 = vmul.f32 %v723, 1.442695
        %v735 = vpow.pop %v734
        %v736 = vmul.f32 %v724, 1.442695
        %v737 = vpow.pop %v736
        %v738 = vmul.f32 %v725, 1.442695
        %v739 = vpow.pop %v738
        %v740 = vmul.f32 %v726, 1.442695
        %v741 = vpow.pop %v740
        %v742 = vmul.f32 %v727, 1.442695
        %v743 = vpow.pop %v742
        %v744 = vsel %vm663, %v729, 0.0
        %v745 = vrot.slane %v744, 4
        %v746 = vadd.f32 %v744, %v745
        %v747 = vrot.slane %v746, 2
        %v748 = vadd.f32 %v746, %v747
        %v749 = vrot.slane %v748, 1
        %v750 = vadd.f32 %v748, %v749
        %v751 = vsel %vm663, %v731, 0.0
        %v752 = vrot.slane %v751, 4
        %v753 = vadd.f32 %v751, %v752
        %v754 = vrot.slane %v753, 2
        %v755 = vadd.f32 %v753, %v754
        %v756 = vrot.slane %v755, 1
        %v757 = vadd.f32 %v755, %v756
        %v758 = vsel %vm663, %v733, 0.0
        %v759 = vrot.slane %v758, 4
        %v760 = vadd.f32 %v758, %v759
        %v761 = vrot.slane %v760, 2
        %v762 = vadd.f32 %v760, %v761
        %v763 = vrot.slane %v762, 1
        %v764 = vadd.f32 %v762, %v763
        %v765 = vsel %vm663, %v735, 0.0
        %v766 = vrot.slane %v765, 4
        %v767 = vadd.f32 %v765, %v766
        %v768 = vrot.slane %v767, 2
        %v769 = vadd.f32 %v767, %v768
        %v770 = vrot.slane %v769, 1
        %v771 = vadd.f32 %v769, %v770
        %v772 = vsel %vm663, %v737, 0.0
        %v773 = vrot.slane %v772, 4
        %v774 = vadd.f32 %v772, %v773
        %v775 = vrot.slane %v774, 2
        %v776 = vadd.f32 %v774, %v775
        %v777 = vrot.slane %v776, 1
        %v778 = vadd.f32 %v776, %v777
        %v779 = vsel %vm663, %v739, 0.0
        %v780 = vrot.slane %v779, 4
        %v781 = vadd.f32 %v779, %v780
        %v782 = vrot.slane %v781, 2
        %v783 = vadd.f32 %v781, %v782
        %v784 = vrot.slane %v783, 1
        %v785 = vadd.f32 %v783, %v784
        %v786 = vsel %vm663, %v741, 0.0
        %v787 = vrot.slane %v786, 4
        %v788 = vadd.f32 %v786, %v787
        %v789 = vrot.slane %v788, 2
        %v790 = vadd.f32 %v788, %v789
        %v791 = vrot.slane %v790, 1
        %v792 = vadd.f32 %v790, %v791
        %v793 = vsel %vm663, %v743, 0.0
        %v794 = vrot.slane %v793, 4
        %v795 = vadd.f32 %v793, %v794
        %v796 = vrot.slane %v795, 2
        %v797 = vadd.f32 %v795, %v796
        %v798 = vrot.slane %v797, 1
        %v799 = vadd.f32 %v797, %v798
        %v800 = vrcp.pop %v750
        %v801 = vrcp.pop %v757
        %v802 = vrcp.pop %v764
        %v803 = vrcp.pop %v771
        %v804 = vrcp.pop %v778
        %v805 = vrcp.pop %v785
        %v806 = vrcp.pop %v792
        %v807 = vrcp.pop %v799
        %v808 = vmul.f32 %v729, %v800
        %v809 = vmul.f32 %v731, %v801
        %v810 = vmul.f32 %v733, %v802
        %v811 = vmul.f32 %v735, %v803
        %v812 = vmul.f32 %v737, %v804
        %v813 = vmul.f32 %v739, %v805
        %v814 = vmul.f32 %v741, %v806
        %v815 = vmul.f32 %v743, %v807
        %817 = vset.pattern.permute.xlu0 0
        %818 = vperm.xlu0 %817, %v808
        %v819 = vpop.permute.xlu0 %818
        %822 = vset.pattern.permute.xlu0 0
        %823 = vperm.xlu0 %822, %v809
        %v824 = vpop.permute.xlu0 %823
        %827 = vset.pattern.permute.xlu0 0
        %828 = vperm.xlu0 %827, %v810
        %v829 = vpop.permute.xlu0 %828
        %832 = vset.pattern.permute.xlu0 0
        %833 = vperm.xlu0 %832, %v811
        %v834 = vpop.permute.xlu0 %833
        %837 = vset.pattern.permute.xlu0 0
        %838 = vperm.xlu0 %837, %v812
        %v839 = vpop.permute.xlu0 %838
        %842 = vset.pattern.permute.xlu0 0
        %843 = vperm.xlu0 %842, %v813
        %v844 = vpop.permute.xlu0 %843
        %847 = vset.pattern.permute.xlu0 0
        %848 = vperm.xlu0 %847, %v814
        %v849 = vpop.permute.xlu0 %848
        %852 = vset.pattern.permute.xlu0 0
        %853 = vperm.xlu0 %852, %v815
        %v854 = vpop.permute.xlu0 %853
        %v856 = vmul.f32 %v819, %v423
        %v857 = vmul.f32 %v824, %v428
        %v858 = vmul.f32 %v829, %v433
        %v859 = vmul.f32 %v834, %v438
        %v860 = vmul.f32 %v839, %v443
        %v861 = vmul.f32 %v844, %v448
        %v862 = vmul.f32 %v849, %v453
        %v863 = vmul.f32 %v854, %v458
        %v864 = vsel %vm258, %v856, 0.0
        %v865 = vrot.slane %v864, 4
        %v866 = vadd.f32 %v864, %v865
        %v867 = vrot.slane %v866, 2
        %v868 = vadd.f32 %v866, %v867
        %v869 = vrot.slane %v868, 1
        %v870 = vadd.f32 %v868, %v869
        %v871 = vsel %vm258, %v857, 0.0
        %v872 = vrot.slane %v871, 4
        %v873 = vadd.f32 %v871, %v872
        %v874 = vrot.slane %v873, 2
        %v875 = vadd.f32 %v873, %v874
        %v876 = vrot.slane %v875, 1
        %v877 = vadd.f32 %v875, %v876
        %v878 = vsel %vm258, %v858, 0.0
        %v879 = vrot.slane %v878, 4
        %v880 = vadd.f32 %v878, %v879
        %v881 = vrot.slane %v880, 2
        %v882 = vadd.f32 %v880, %v881
        %v883 = vrot.slane %v882, 1
        %v884 = vadd.f32 %v882, %v883
        %v885 = vsel %vm258, %v859, 0.0
        %v886 = vrot.slane %v885, 4
        %v887 = vadd.f32 %v885, %v886
        %v888 = vrot.slane %v887, 2
        %v889 = vadd.f32 %v887, %v888
        %v890 = vrot.slane %v889, 1
        %v891 = vadd.f32 %v889, %v890
        %v892 = vsel %vm258, %v860, 0.0
        %v893 = vrot.slane %v892, 4
        %v894 = vadd.f32 %v892, %v893
        %v895 = vrot.slane %v894, 2
        %v896 = vadd.f32 %v894, %v895
        %v897 = vrot.slane %v896, 1
        %v898 = vadd.f32 %v896, %v897
        %v899 = vsel %vm258, %v861, 0.0
        %v900 = vrot.slane %v899, 4
        %v901 = vadd.f32 %v899, %v900
        %v902 = vrot.slane %v901, 2
        %v903 = vadd.f32 %v901, %v902
        %v904 = vrot.slane %v903, 1
        %v905 = vadd.f32 %v903, %v904
        %v906 = vsel %vm258, %v862, 0.0
        %v907 = vrot.slane %v906, 4
        %v908 = vadd.f32 %v906, %v907
        %v909 = vrot.slane %v908, 2
        %v910 = vadd.f32 %v908, %v909
        %v911 = vrot.slane %v910, 1
        %v912 = vadd.f32 %v910, %v911
        %v913 = vsel %vm258, %v863, 0.0
        %v914 = vrot.slane %v913, 4
        %v915 = vadd.f32 %v913, %v914
        %v916 = vrot.slane %v915, 2
        %v917 = vadd.f32 %v915, %v916
        %v918 = vrot.slane %v917, 1
        %v919 = vadd.f32 %v917, %v918
        %v920 = vsel %vm663, %v250, 0.0
        %v921 = vrot.slane %v920, 4
        %v922 = vadd.f32 %v920, %v921
        %v923 = vrot.slane %v922, 2
        %v924 = vadd.f32 %v922, %v923
        %v925 = vrot.slane %v924, 1
        %v926 = vadd.f32 %v924, %v925
        %v927 = vsel %vm663, %v251, 0.0
        %v928 = vrot.slane %v927, 4
        %v929 = vadd.f32 %v927, %v928
        %v930 = vrot.slane %v929, 2
        %v931 = vadd.f32 %v929, %v930
        %v932 = vrot.slane %v931, 1
        %v933 = vadd.f32 %v931, %v932
        %v934 = vsel %vm663, %v252, 0.0
        %v935 = vrot.slane %v934, 4
        %v936 = vadd.f32 %v934, %v935
        %v937 = vrot.slane %v936, 2
        %v938 = vadd.f32 %v936, %v937
        %v939 = vrot.slane %v938, 1
        %v940 = vadd.f32 %v938, %v939
        %v941 = vsel %vm663, %v253, 0.0
        %v942 = vrot.slane %v941, 4
        %v943 = vadd.f32 %v941, %v942
        %v944 = vrot.slane %v943, 2
        %v945 = vadd.f32 %v943, %v944
        %v946 = vrot.slane %v945, 1
        %v947 = vadd.f32 %v945, %v946
        %v948 = vsel %vm663, %v254, 0.0
        %v949 = vrot.slane %v948, 4
        %v950 = vadd.f32 %v948, %v949
        %v951 = vrot.slane %v950, 2
        %v952 = vadd.f32 %v950, %v951
        %v953 = vrot.slane %v952, 1
        %v954 = vadd.f32 %v952, %v953
        %v955 = vsel %vm663, %v255, 0.0
        %v956 = vrot.slane %v955, 4
        %v957 = vadd.f32 %v955, %v956
        %v958 = vrot.slane %v957, 2
        %v959 = vadd.f32 %v957, %v958
        %v960 = vrot.slane %v959, 1
        %v961 = vadd.f32 %v959, %v960
        %v962 = vsel %vm663, %v256, 0.0
        %v963 = vrot.slane %v962, 4
        %v964 = vadd.f32 %v962, %v963
        %v965 = vrot.slane %v964, 2
        %v966 = vadd.f32 %v964, %v965
        %v967 = vrot.slane %v966, 1
        %v968 = vadd.f32 %v966, %v967
        %v969 = vsel %vm663, %v257, 0.0
        %v970 = vrot.slane %v969, 4
        %v971 = vadd.f32 %v969, %v970
        %v972 = vrot.slane %v971, 2
        %v973 = vadd.f32 %v971, %v972
        %v974 = vrot.slane %v973, 1
        %v975 = vadd.f32 %v973, %v974
        %vm976 = vcmp.gt.f32.partialorder %v926, 0.0
        %vm977 = vcmp.gt.f32.partialorder %v933, 0.0
        %vm978 = vcmp.gt.f32.partialorder %v940, 0.0
        %vm979 = vcmp.gt.f32.partialorder %v947, 0.0
        %vm980 = vcmp.gt.f32.partialorder %v954, 0.0
        %vm981 = vcmp.gt.f32.partialorder %v961, 0.0
        %vm982 = vcmp.gt.f32.partialorder %v968, 0.0
        %vm983 = vcmp.gt.f32.partialorder %v975, 0.0
        %v984 = vsel %vm976, 1, 0
        %v985 = vsel %vm977, 1, 0
        %v986 = vsel %vm978, 1, 0
        %v987 = vsel %vm979, 1, 0
        %v988 = vsel %vm980, 1, 0
        %v989 = vsel %vm981, 1, 0
        %v990 = vsel %vm982, 1, 0
        %v991 = vsel %vm983, 1, 0
        %v992 = vcvt.s32.f32 %v984
        %v993 = vcvt.s32.f32 %v985
        %v994 = vcvt.s32.f32 %v986
        %v995 = vcvt.s32.f32 %v987
        %v996 = vcvt.s32.f32 %v988
        %v997 = vcvt.s32.f32 %v989
        %v998 = vcvt.s32.f32 %v990
        %v999 = vcvt.s32.f32 %v991
        %1001 = vset.pattern.permute.xlu0 0
        %1002 = vperm.xlu0 %1001, %v992
        %v1003 = vpop.permute.xlu0 %1002
        %1006 = vset.pattern.permute.xlu0 0
        %1007 = vperm.xlu0 %1006, %v993
        %v1008 = vpop.permute.xlu0 %1007
        %1011 = vset.pattern.permute.xlu0 0
        %1012 = vperm.xlu0 %1011, %v994
        %v1013 = vpop.permute.xlu0 %1012
        %1016 = vset.pattern.permute.xlu0 0
        %1017 = vperm.xlu0 %1016, %v995
        %v1018 = vpop.permute.xlu0 %1017
        %1021 = vset.pattern.permute.xlu0 0
        %1022 = vperm.xlu0 %1021, %v996
        %v1023 = vpop.permute.xlu0 %1022
        %1026 = vset.pattern.permute.xlu0 0
        %1027 = vperm.xlu0 %1026, %v997
        %v1028 = vpop.permute.xlu0 %1027
        %1031 = vset.pattern.permute.xlu0 0
        %1032 = vperm.xlu0 %1031, %v998
        %v1033 = vpop.permute.xlu0 %1032
        %1036 = vset.pattern.permute.xlu0 0
        %1037 = vperm.xlu0 %1036, %v999
        %v1038 = vpop.permute.xlu0 %1037
        %v1040 = vmul.f32 %v870, %v1003
        %v1041 = vmul.f32 %v877, %v1008
        %v1042 = vmul.f32 %v884, %v1013
        %v1043 = vmul.f32 %v891, %v1018
        %v1044 = vmul.f32 %v898, %v1023
        %v1045 = vmul.f32 %v905, %v1028
        %v1046 = vmul.f32 %v912, %v1033
        %v1047 = vmul.f32 %v919, %v1038
        %vm1056 = vcmask 1041409
        %v1057 = vsel %vm1056, %v1041, %v1040
        %vm1058 = vcmask 1042434
        %v1059 = vsel %vm1058, %v1042, %v1057
        %vm1060 = vcmask 1043459
        %v1061 = vsel %vm1060, %v1043, %v1059
        %vm1062 = vcmask 1044484
        %v1063 = vsel %vm1062, %v1044, %v1061
        %vm1064 = vcmask 1045509
        %v1065 = vsel %vm1064, %v1045, %v1063
        %vm1066 = vcmask 1046534
        %v1067 = vsel %vm1066, %v1046, %v1065
        %vm1068 = vcmask 1047559
        %v1069 = vsel %vm1068, %v1047, %v1067
        %v1071 = vadd.f32 %v329, %v1069
        %vm1072 = vcmp.gt.f32.partialorder %v1071, 0.0
        %v1073 = vmin.f32 %v1071, 0.0
        %v1074 = vmul.f32 %v1073, 1.442695
        %v1075 = vpow.pop %v1074
        %v1076 = vsub.f32 %v1075, 1.0
        %v1077 = vsel %vm1072, %v1071, %v1076
        %1078 = vst.msk [vmem:[%s220] sm:$0xff] %vm258, %v1077
        %s1079 = sand.u32 %s125, 1
        %s1080 = scalar_lea.sflag [#allocation3], %s1079
        %s1081 = sand.u32 %s125, 1
        %s1082 = smul.addr %s1081, 8
        %s1083 = scalar_lea.vmem [#allocation2], %s1082
        // Predicated region
        $region37: #{tpu_custom_call.1} parent=35 // pred_check
          %p1084 = pneg %p135
        $region38: #{tpu_custom_call.1} parent=35 // pred_check_branch
          %1086 = sbr.rel (%p1084) target = $region40
        $region39: #{tpu_custom_call.1} parent=35 // pred_region
          %s1088 = ssub.s32 128, 128
          %1089 = vsyncadd %s1080, %s1088
          %s1090 = smul.addr %s18, 128
          %s1091 = scalar_lea.hbm %s4, %s1090
          %s1093 = sshll.u32 %s1083, 4
          %s1094 = int_to_ptr.vmem [resolvable:$true] %s1093
          %1096 = dma.vmem_to_hbm [thread:$0]  %s1094, 128, %s1091, %s1080
        $region40: #{tpu_custom_call.1} parent=35 // pred_fallthru
          _
      $region36: #{tpu_custom_call.1} parent=5 // pred_fallthru
        _
      %p1097 = scmp.le.s32.totalorder 2, %s13
      // Predicated region
      $region41: #{tpu_custom_call.1} parent=5 // pred_check
        %p1098 = pneg %p1097
      $region42: #{tpu_custom_call.1} parent=5 // pred_check_branch
        %1100 = sbr.rel (%p1098) target = $region44
      $region43: #{tpu_custom_call.1} parent=5 // pred_region
        %s1101 = ssub.s32 %s13, 2
        // Predicated region
        $region45: #{tpu_custom_call.1} parent=43 // pred_check
          %p1102 = pneg %p141
        $region46: #{tpu_custom_call.1} parent=43 // pred_check_branch
          %1104 = sbr.rel (%p1102) target = $region48
        $region47: #{tpu_custom_call.1} parent=43 // pred_region
          %s1105 = sand.u32 %s126, 1
          %s1106 = scalar_lea.sflag [#allocation3], %s1105
          %s1107 = sand.u32 %s126, 1
          %s1108 = smul.addr %s1107, 8
          %s1109 = scalar_lea.vmem [#allocation2], %s1108
          %1110 = dma.done %s1106, 128
        $region48: #{tpu_custom_call.1} parent=43 // pred_fallthru
          _
      $region44: #{tpu_custom_call.1} parent=5 // pred_fallthru
        _
    $region6: #{tpu_custom_call.1} parent=1 // loop_footer
      %s17 = sadd.s32 1, %s13
    $region7: #{tpu_custom_call.1} parent=1 // loop_footer_branch
      %12 = sbr.rel target = $region3
    $region8: #{tpu_custom_call.1} parent=1 // loop_exit
      _
    %1111 = vsyncpa [#allocation3], 1
    %s1112 = scalar_lea.sflag [#allocation3], 1
    %1113 = vsyncpa %s1112, 1

</llo_original>
